<compile_context>
chip_gen: v7x
topology: tpu7x:2x2x1
jax: 0.10.0
libtpu: 0.0.40
codegen_flags: <defaults>
</compile_context>

<pallas_src>
import jax
import jax.numpy as jnp
from jax.experimental import pallas as pl
from jax.experimental.pallas import tpu as pltpu

BN_EPS = 1e-5


def _attention_kernel(g_ref, x_ref, wg_ref, wx_ref, b_ref, wpsi_ref, bpsi_ref,
                      out_ref):
    """One (B_blk, C, T_pix) tile: channels on sublanes, pixels on lanes."""
    f32 = jnp.float32
    wg = wg_ref[...]            # (F_int, C)  stream/mat dtype
    wx = wx_ref[...]            # (F_int, C)
    b_bias = b_ref[...]         # (F_int, 1)  f32, lane-broadcast
    wpsi = wpsi_ref[...]        # (F_int, 1)  f32
    bpsi = bpsi_ref[0]          # scalar (SMEM)

    for bi in range(g_ref.shape[0]):            # B_blk is a trace-time constant
        g = g_ref[bi]                           # (C, T)
        x = x_ref[bi]                           # (C, T)

        # Gating: a = relu(Wg' @ g + Wx' @ x + (bg' + bx'))   -> (F_int, T) f32
        a = jnp.dot(wg, g, preferred_element_type=f32)
        a = a + jnp.dot(wx, x, preferred_element_type=f32)
        a = jnp.maximum(a + b_bias, 0.0)

        # psi projection: F_int is tiny -> VPU multiply + sublane reduce
        # (lane-dense (1, T) row); sigmoid stays in f32 on the EUP.
        psi = jax.nn.sigmoid(jnp.sum(a * wpsi, axis=0, keepdims=True) + bpsi)

        # Sublane broadcast of psi over channels.
        out_ref[bi] = (x.astype(f32) * psi).astype(out_ref.dtype)


def _round_up(v, m):
    return (v + m - 1) // m * m


def _vmem_capacity_bytes():
    try:
        return int(pltpu.get_tpu_info().vmem_capacity_bytes)
    except Exception:
        return 64 << 20        # conservative: v7x has 64 MiB per TensorCore


def _fold_bn(conv_w, conv_b, gamma, beta, running_mean, running_var, eps=BN_EPS):
    """Fold eval-mode BatchNorm into a 1x1 conv (w_eff @ y + b_eff == BN(conv(y)))."""
    scale = gamma / jnp.sqrt(running_var + eps)          # (C_out,)
    w_eff = conv_w * scale[:, None]
    b_eff = (conv_b - running_mean) * scale + beta
    return w_eff, b_eff


def attention_block(g_nchw, x_nchw, params, *, tile_pix=None, batch_block=None,
                    stream_dtype=None, vmem_limit_bytes=None):
    """g_nchw, x_nchw: (N, C, H, W). Returns (N, C, H, W) in the streamed dtype."""
    N, C, H, W = x_nchw.shape
    assert g_nchw.shape == x_nchw.shape
    HW = H * W
    F_int = params["wg"].shape[0]

    # ---- fold BN into the 1x1 convs (tiny, plain JAX glue) -------------------
    wg, bg = _fold_bn(params["wg"], params["bg"], params["bn_g_gamma"],
                      params["bn_g_beta"], params["bn_g_mean"], params["bn_g_var"])
    wx, bx = _fold_bn(params["wx"], params["bx"], params["bn_x_gamma"],
                      params["bn_x_beta"], params["bn_x_mean"], params["bn_x_var"])
    wpsi, bpsi = _fold_bn(params["wpsi"], params["bpsi"], params["bn_p_gamma"],
                          params["bn_p_beta"], params["bn_p_mean"], params["bn_p_var"])

    # ---- streamed dtype: keep the incoming dtype unless overridden ----------
    if stream_dtype is None:
        stream_dtype = x_nchw.dtype
    stream_dtype = jnp.dtype(stream_dtype)
    # NCHW -> (N, C, H*W): pure reshape, no transpose.  No forced f32 upcast.
    g3 = g_nchw.reshape(N, C, HW).astype(stream_dtype)
    x3 = x_nchw.reshape(N, C, HW).astype(stream_dtype)

    # bf16 streaming -> bf16 MXU operands (f32 accumulate); f32 keeps parity.
    mat_dtype = jnp.bfloat16 if stream_dtype == jnp.bfloat16 else jnp.float32
    wg_k = wg.astype(mat_dtype)
    wx_k = wx.astype(mat_dtype)
    b_comb = (bg + bx).reshape(F_int, 1).astype(jnp.float32)   # fused gating bias
    wpsi_col = wpsi.reshape(F_int, 1).astype(jnp.float32)      # (F_int, 1)
    bpsi1 = bpsi.reshape(1).astype(jnp.float32)                # scalar -> SMEM

    # ---- batch blocking: several images per step when C under-fills sublanes -
    if batch_block is None:
        batch_block = 1
        if C < 8 and N > 1:
            want = max(1, 8 // max(C, 1))
            for cand in range(min(N, want), 0, -1):
                if N % cand == 0:
                    batch_block = cand
                    break
    assert N % batch_block == 0
    B_blk = int(batch_block)

    # ---- generation-aware lane-tile sizing -----------------------------------
    C_pad = _round_up(C, 8)                 # VMEM sublane padding of a block
    isz = stream_dtype.itemsize
    vmem_cap = _vmem_capacity_bytes()
    if tile_pix is None:
        if HW <= 128:
            tile_pix = HW                   # full lane dim (allowed unpadded)
        else:
            budget = max(4 << 20, min(32 << 20, vmem_cap // 4))
            # g + x + out streams, each double-buffered by the Pallas pipeline.
            per_pix = 2 * 3 * B_blk * C_pad * isz
            t = (budget // per_pix) // 128 * 128
            lane_cap = 16384 if C_pad <= 64 else 8192
            tile_pix = int(max(128, min(lane_cap, t, _round_up(HW, 128))))
    assert tile_pix == HW or tile_pix % 128 == 0

    n_pix_tiles = pl.cdiv(HW, tile_pix)     # ragged last tile handled by masking

    if vmem_limit_bytes is None:
        block_bytes = B_blk * C_pad * tile_pix * isz
        vmem_limit_bytes = int(min(vmem_cap // 2,
                                   max(16 << 20, 3 * 2 * block_bytes + (2 << 20))))

    data_map = lambda p, n: (n, 0, p)       # pixel axis first (TC sharding)
    const_map = lambda p, n: (0, 0)         # resident weights / biases

    out3 = pl.pallas_call(
        _attention_kernel,
        out_shape=jax.ShapeDtypeStruct((N, C, HW), stream_dtype),
        grid_spec=pltpu.PrefetchScalarGridSpec(
            num_scalar_prefetch=0,
            grid=(n_pix_tiles, N // B_blk),
            in_specs=[
                # TODO(synk): if a profile shows exposed DMA at this tile size,
                # add pipeline_mode=pl.Buffered(3) to the g/x specs and re-check
                # the VMEM budget (3 buffers per stream instead of 2).
                pl.BlockSpec((B_blk, C, tile_pix), data_map),         # g tile
                pl.BlockSpec((B_blk, C, tile_pix), data_map),         # x tile
                pl.BlockSpec((F_int, C), const_map),                  # Wg'
                pl.BlockSpec((F_int, C), const_map),                  # Wx'
                pl.BlockSpec((F_int, 1), const_map),                  # bg'+bx'
                pl.BlockSpec((F_int, 1), const_map),                  # wpsi'
                pl.BlockSpec(memory_space=pltpu.MemorySpace.SMEM),    # bpsi'
            ],
            out_specs=pl.BlockSpec((B_blk, C, tile_pix), data_map),
        ),
        compiler_params=pltpu.CompilerParams(
            dimension_semantics=("parallel", "parallel"),
            vmem_limit_bytes=vmem_limit_bytes),
    )(g3, x3, wg_k, wx_k, b_comb, wpsi_col, bpsi1)

    return out3.reshape(N, C, H, W)


def init_params(key, F_g, F_l, F_int):
    """Deterministic synthetic params matching the PyTorch module's shapes.

    Conv weights use PyTorch's (C_out, C_in) layout (trailing 1x1 squeezed).
    BN uses eval-mode semantics with fresh-init running stats (mean=0, var=1).
    """
    ks = jax.random.split(key, 6)
    return {
        # W_g branch: Conv2d(F_l -> F_int) + BN(F_int)
        "wg": jax.random.normal(ks[0], (F_int, F_l), jnp.float32) * 0.1,
        "bg": jax.random.normal(ks[1], (F_int,), jnp.float32) * 0.1,
        "bn_g_gamma": jnp.ones((F_int,), jnp.float32),
        "bn_g_beta": jnp.zeros((F_int,), jnp.float32),
        "bn_g_mean": jnp.zeros((F_int,), jnp.float32),
        "bn_g_var": jnp.ones((F_int,), jnp.float32),
        # W_x branch: Conv2d(F_g -> F_int) + BN(F_int)
        "wx": jax.random.normal(ks[2], (F_int, F_g), jnp.float32) * 0.1,
        "bx": jax.random.normal(ks[3], (F_int,), jnp.float32) * 0.1,
        "bn_x_gamma": jnp.ones((F_int,), jnp.float32),
        "bn_x_beta": jnp.zeros((F_int,), jnp.float32),
        "bn_x_mean": jnp.zeros((F_int,), jnp.float32),
        "bn_x_var": jnp.ones((F_int,), jnp.float32),
        # psi branch: Conv2d(F_int -> 1) + BN(1) + Sigmoid
        "wpsi": jax.random.normal(ks[4], (1, F_int), jnp.float32) * 0.1,
        "bpsi": jax.random.normal(ks[5], (1,), jnp.float32) * 0.1,
        "bn_p_gamma": jnp.ones((1,), jnp.float32),
        "bn_p_beta": jnp.zeros((1,), jnp.float32),
        "bn_p_mean": jnp.zeros((1,), jnp.float32),
        "bn_p_var": jnp.ones((1,), jnp.float32),
    }


def _reference(g_nchw, x_nchw, params):
    """Pure-JAX NCHW reference (same eval-mode BN folding) for sanity check."""
    wg, bg = _fold_bn(params["wg"], params["bg"], params["bn_g_gamma"],
                      params["bn_g_beta"], params["bn_g_mean"], params["bn_g_var"])
    wx, bx = _fold_bn(params["wx"], params["bx"], params["bn_x_gamma"],
                      params["bn_x_beta"], params["bn_x_mean"], params["bn_x_var"])
    wpsi, bpsi = _fold_bn(params["wpsi"], params["bpsi"], params["bn_p_gamma"],
                          params["bn_p_beta"], params["bn_p_mean"], params["bn_p_var"])
    g1 = jnp.einsum("oc,nchw->nohw", wg, g_nchw) + bg[None, :, None, None]
    x1 = jnp.einsum("oc,nchw->nohw", wx, x_nchw) + bx[None, :, None, None]
    a = jnp.maximum(g1 + x1, 0.0)
    psi = jax.nn.sigmoid(jnp.einsum("of,nfhw->nohw", wpsi, a)
                         + bpsi[None, :, None, None])
    return x_nchw * psi


if __name__ == "__main__":
    key = jax.random.PRNGKey(0)
    kg, kx, kp = jax.random.split(key, 3)

    N, C, H, W = 2, 4, 16, 16          # F_g = F_l = C
    F_int = 8

    g = jax.random.normal(kg, (N, C, H, W), jnp.float32)
    x = jax.random.normal(kx, (N, C, H, W), jnp.float32)
    params = init_params(kp, F_g=C, F_l=C, F_int=F_int)

    # 1) f32 streaming: bit-parity with the f32 PyTorch module.
    out = jax.block_until_ready(attention_block(g, x, params))
    ref = _reference(g, x, params)
    assert out.shape == (N, C, H, W)
    assert out.dtype == jnp.float32
    assert jnp.allclose(out, ref, atol=1e-4, rtol=1e-4)

    # 2) bf16 streaming: halves HBM bytes; ~1e-2-level psi error is expected
    #    and accepted (parity intentionally traded for bandwidth).
    g16 = g.astype(jnp.bfloat16)
    x16 = x.astype(jnp.bfloat16)
    out16 = jax.block_until_ready(attention_block(g16, x16, params))
    ref16 = _reference(g16.astype(jnp.float32), x16.astype(jnp.float32), params)
    assert out16.dtype == jnp.bfloat16
    assert jnp.allclose(out16.astype(jnp.float32), ref16, atol=5e-2, rtol=5e-2)

    # 3) Ragged spatial size (HW % 128 != 0) exercises the pad-free masked
    #    boundary-tile path (no jnp.pad, no output slice copy).
    Hr = Wr = 20
    gr = jax.random.normal(kg, (N, C, Hr, Wr), jnp.float32)
    xr = jax.random.normal(kx, (N, C, Hr, Wr), jnp.float32)
    outr = jax.block_until_ready(attention_block(gr, xr, params, tile_pix=128))
    refr = _reference(gr, xr, params)
    assert jnp.allclose(outr, refr, atol=1e-4, rtol=1e-4)

    print("KERNEL_OK")
</pallas_src>

<mosaic_0001>
module attributes {stable_mosaic.version = 11 : i64} {
  func.func @_attention_kernel(%arg0: i32, %arg1: i32, %arg2: memref<2x4x256xf32, #tpu.memory_space<vmem>>, %arg3: memref<2x4x256xf32, #tpu.memory_space<vmem>>, %arg4: memref<8x4xf32, #tpu.memory_space<vmem>>, %arg5: memref<8x4xf32, #tpu.memory_space<vmem>>, %arg6: memref<8x1xf32, #tpu.memory_space<vmem>>, %arg7: memref<8x1xf32, #tpu.memory_space<vmem>>, %arg8: memref<1xf32, #tpu.memory_space<smem>>, %arg9: memref<2x4x256xf32, #tpu.memory_space<vmem>>) attributes {dimension_semantics = [#tpu.dimension_semantics<parallel>, #tpu.dimension_semantics<parallel>], iteration_bounds = array<i64: 1, 1>, scalar_prefetch = 0 : i64, scratch_operands = 0 : i64, tpu.core_type = #tpu.core_type<tc>, window_params = [{transform_indices = @transform_0, window_bounds = array<i64: 2, 4, 256>}, {transform_indices = @transform_1, window_bounds = array<i64: 2, 4, 256>}, {pipeline_mode = #tpu.pipeline_mode<synchronous>, transform_indices = @transform_2, window_bounds = array<i64: 8, 4>}, {pipeline_mode = #tpu.pipeline_mode<synchronous>, transform_indices = @transform_3, window_bounds = array<i64: 8, 4>}, {pipeline_mode = #tpu.pipeline_mode<synchronous>, transform_indices = @transform_4, window_bounds = array<i64: 8, 1>}, {pipeline_mode = #tpu.pipeline_mode<synchronous>, transform_indices = @transform_5, window_bounds = array<i64: 8, 1>}, {transform_indices = @transform_6, window_bounds = array<i64: 1>}, {transform_indices = @transform_7, window_bounds = array<i64: 2, 4, 256>}]} {
    %c0 = arith.constant 0 : index
    %c0_0 = arith.constant 0 : index
    %0 = vector.load %arg4[%c0, %c0_0] : memref<8x4xf32, #tpu.memory_space<vmem>>, vector<8x4xf32>
    %c0_1 = arith.constant 0 : index
    %c0_2 = arith.constant 0 : index
    %1 = vector.load %arg5[%c0_1, %c0_2] : memref<8x4xf32, #tpu.memory_space<vmem>>, vector<8x4xf32>
    %c0_3 = arith.constant 0 : index
    %c0_4 = arith.constant 0 : index
    %2 = vector.load %arg6[%c0_3, %c0_4] : memref<8x1xf32, #tpu.memory_space<vmem>>, vector<8x1xf32>
    %c0_5 = arith.constant 0 : index
    %c0_6 = arith.constant 0 : index
    %3 = vector.load %arg7[%c0_5, %c0_6] : memref<8x1xf32, #tpu.memory_space<vmem>>, vector<8x1xf32>
    %c0_7 = arith.constant 0 : index
    %4 = memref.load %arg8[%c0_7] : memref<1xf32, #tpu.memory_space<smem>>
    %c0_8 = arith.constant 0 : index
    %c0_9 = arith.constant 0 : index
    %c0_10 = arith.constant 0 : index
    %5 = vector.load %arg2[%c0_8, %c0_9, %c0_10] : memref<2x4x256xf32, #tpu.memory_space<vmem>>, vector<1x4x256xf32>
    %6 = vector.shape_cast %5 : vector<1x4x256xf32> to vector<4x256xf32>
    %c0_11 = arith.constant 0 : index
    %c0_12 = arith.constant 0 : index
    %c0_13 = arith.constant 0 : index
    %7 = vector.load %arg3[%c0_11, %c0_12, %c0_13] : memref<2x4x256xf32, #tpu.memory_space<vmem>>, vector<1x4x256xf32>
    %8 = vector.shape_cast %7 : vector<1x4x256xf32> to vector<4x256xf32>
    %cst = arith.constant dense<0.000000e+00> : vector<8x256xf32>
    %9 = tpu.matmul %0, %6, %cst {dimension_numbers = #tpu.dot_dimension_numbers<[1], [0], [0], [1], [0, 0, 1, 1], [], []>} : vector<8x4xf32>, vector<4x256xf32>, vector<8x256xf32> -> vector<8x256xf32>
    %cst_14 = arith.constant dense<0.000000e+00> : vector<8x256xf32>
    %10 = tpu.matmul %1, %8, %cst_14 {dimension_numbers = #tpu.dot_dimension_numbers<[1], [0], [0], [1], [0, 0, 1, 1], [], []>} : vector<8x4xf32>, vector<4x256xf32>, vector<8x256xf32> -> vector<8x256xf32>
    %11 = arith.addf %9, %10 : vector<8x256xf32>
    %12 = vector.broadcast %2 : vector<8x1xf32> to vector<8x256xf32>
    %13 = arith.addf %11, %12 : vector<8x256xf32>
    %cst_15 = arith.constant 0.000000e+00 : f32
    %14 = vector.broadcast %cst_15 : f32 to vector<8x256xf32>
    %15 = arith.maximumf %13, %14 : vector<8x256xf32>
    %16 = vector.broadcast %3 : vector<8x1xf32> to vector<8x256xf32>
    %17 = arith.mulf %15, %16 : vector<8x256xf32>
    %cst_16 = arith.constant dense<0.000000e+00> : vector<256xf32>
    %18 = vector.multi_reduction <add>, %17, %cst_16 [0] : vector<8x256xf32> to vector<256xf32>
    %19 = vector.shape_cast %18 : vector<256xf32> to vector<1x256xf32>
    %20 = vector.broadcast %4 : f32 to vector<1x256xf32>
    %21 = arith.addf %19, %20 : vector<1x256xf32>
    %22 = arith.negf %21 : vector<1x256xf32>
    %23 = math.exp %22 : vector<1x256xf32>
    %cst_17 = arith.constant 1.000000e+00 : f32
    %24 = vector.broadcast %cst_17 : f32 to vector<1x256xf32>
    %25 = arith.addf %24, %23 : vector<1x256xf32>
    %26 = arith.divf %24, %25 : vector<1x256xf32>
    %27 = vector.broadcast %26 : vector<1x256xf32> to vector<4x256xf32>
    %28 = arith.mulf %8, %27 : vector<4x256xf32>
    %c0_18 = arith.constant 0 : index
    %c0_19 = arith.constant 0 : index
    %c0_20 = arith.constant 0 : index
    %29 = vector.load %arg9[%c0_18, %c0_19, %c0_20] : memref<2x4x256xf32, #tpu.memory_space<vmem>>, vector<1x4x256xf32>
    %30 = vector.shape_cast %29 : vector<1x4x256xf32> to vector<4x256xf32>
    %31 = vector.shape_cast %28 : vector<4x256xf32> to vector<1x4x256xf32>
    tpu.vector_store %arg9[%c0_18, %c0_19, %c0_20], %31 {strides = array<i32>} : memref<2x4x256xf32, #tpu.memory_space<vmem>>, vector<1x4x256xf32>,
    %c1 = arith.constant 1 : index
    %c0_21 = arith.constant 0 : index
    %c0_22 = arith.constant 0 : index
    %32 = vector.load %arg2[%c1, %c0_21, %c0_22] : memref<2x4x256xf32, #tpu.memory_space<vmem>>, vector<1x4x256xf32>
    %33 = vector.shape_cast %32 : vector<1x4x256xf32> to vector<4x256xf32>
    %c1_23 = arith.constant 1 : index
    %c0_24 = arith.constant 0 : index
    %c0_25 = arith.constant 0 : index
    %34 = vector.load %arg3[%c1_23, %c0_24, %c0_25] : memref<2x4x256xf32, #tpu.memory_space<vmem>>, vector<1x4x256xf32>
    %35 = vector.shape_cast %34 : vector<1x4x256xf32> to vector<4x256xf32>
    %cst_26 = arith.constant dense<0.000000e+00> : vector<8x256xf32>
    %36 = tpu.matmul %0, %33, %cst_26 {dimension_numbers = #tpu.dot_dimension_numbers<[1], [0], [0], [1], [0, 0, 1, 1], [], []>} : vector<8x4xf32>, vector<4x256xf32>, vector<8x256xf32> -> vector<8x256xf32>
    %cst_27 = arith.constant dense<0.000000e+00> : vector<8x256xf32>
    %37 = tpu.matmul %1, %35, %cst_27 {dimension_numbers = #tpu.dot_dimension_numbers<[1], [0], [0], [1], [0, 0, 1, 1], [], []>} : vector<8x4xf32>, vector<4x256xf32>, vector<8x256xf32> -> vector<8x256xf32>
    %38 = arith.addf %36, %37 : vector<8x256xf32>
    %39 = vector.broadcast %2 : vector<8x1xf32> to vector<8x256xf32>
    %40 = arith.addf %38, %39 : vector<8x256xf32>
    %cst_28 = arith.constant 0.000000e+00 : f32
    %41 = vector.broadcast %cst_28 : f32 to vector<8x256xf32>
    %42 = arith.maximumf %40, %41 : vector<8x256xf32>
    %43 = vector.broadcast %3 : vector<8x1xf32> to vector<8x256xf32>
    %44 = arith.mulf %42, %43 : vector<8x256xf32>
    %cst_29 = arith.constant dense<0.000000e+00> : vector<256xf32>
    %45 = vector.multi_reduction <add>, %44, %cst_29 [0] : vector<8x256xf32> to vector<256xf32>
    %46 = vector.shape_cast %45 : vector<256xf32> to vector<1x256xf32>
    %47 = vector.broadcast %4 : f32 to vector<1x256xf32>
    %48 = arith.addf %46, %47 : vector<1x256xf32>
    %49 = arith.negf %48 : vector<1x256xf32>
    %50 = math.exp %49 : vector<1x256xf32>
    %cst_30 = arith.constant 1.000000e+00 : f32
    %51 = vector.broadcast %cst_30 : f32 to vector<1x256xf32>
    %52 = arith.addf %51, %50 : vector<1x256xf32>
    %53 = arith.divf %51, %52 : vector<1x256xf32>
    %54 = vector.broadcast %53 : vector<1x256xf32> to vector<4x256xf32>
    %55 = arith.mulf %35, %54 : vector<4x256xf32>
    %c1_31 = arith.constant 1 : index
    %c0_32 = arith.constant 0 : index
    %c0_33 = arith.constant 0 : index
    %56 = vector.load %arg9[%c1_31, %c0_32, %c0_33] : memref<2x4x256xf32, #tpu.memory_space<vmem>>, vector<1x4x256xf32>
    %57 = vector.shape_cast %56 : vector<1x4x256xf32> to vector<4x256xf32>
    %58 = vector.shape_cast %55 : vector<4x256xf32> to vector<1x4x256xf32>
    tpu.vector_store %arg9[%c1_31, %c0_32, %c0_33], %58 {strides = array<i32>} : memref<2x4x256xf32, #tpu.memory_space<vmem>>, vector<1x4x256xf32>,
    return
  }
  func.func @transform_0(%arg0: i32, %arg1: i32) -> (i32, i32, i32) {
    %c0_i32 = arith.constant 0 : i32
    %c0_i32_0 = arith.constant 0 : i32
    return %arg1, %c0_i32, %arg0 : i32, i32, i32
  }
  func.func @transform_1(%arg0: i32, %arg1: i32) -> (i32, i32, i32) {
    %c0_i32 = arith.constant 0 : i32
    %c0_i32_0 = arith.constant 0 : i32
    return %arg1, %c0_i32, %arg0 : i32, i32, i32
  }
  func.func @transform_2(%arg0: i32, %arg1: i32) -> (i32, i32) {
    %c0_i32 = arith.constant 0 : i32
    %c0_i32_0 = arith.constant 0 : i32
    %c0_i32_1 = arith.constant 0 : i32
    return %c0_i32, %c0_i32_0 : i32, i32
  }
  func.func @transform_3(%arg0: i32, %arg1: i32) -> (i32, i32) {
    %c0_i32 = arith.constant 0 : i32
    %c0_i32_0 = arith.constant 0 : i32
    %c0_i32_1 = arith.constant 0 : i32
    return %c0_i32, %c0_i32_0 : i32, i32
  }
  func.func @transform_4(%arg0: i32, %arg1: i32) -> (i32, i32) {
    %c0_i32 = arith.constant 0 : i32
    %c0_i32_0 = arith.constant 0 : i32
    %c0_i32_1 = arith.constant 0 : i32
    return %c0_i32, %c0_i32_0 : i32, i32
  }
  func.func @transform_5(%arg0: i32, %arg1: i32) -> (i32, i32) {
    %c0_i32 = arith.constant 0 : i32
    %c0_i32_0 = arith.constant 0 : i32
    %c0_i32_1 = arith.constant 0 : i32
    return %c0_i32, %c0_i32_0 : i32, i32
  }
  func.func @transform_6(%arg0: i32, %arg1: i32) -> i32 {
    %c0_i32 = arith.constant 0 : i32
    %c0_i32_0 = arith.constant 0 : i32
    return %c0_i32 : i32
  }
  func.func @transform_7(%arg0: i32, %arg1: i32) -> (i32, i32, i32) {
    %c0_i32 = arith.constant 0 : i32
    %c0_i32_0 = arith.constant 0 : i32
    return %arg1, %c0_i32, %arg0 : i32, i32, i32
  }
}

</mosaic_0001>

<llo_original>
// kernel: tpu_custom_call.1
$region0: #{tpu_custom_call.1}
  #allocation0 [shape = 'u32[]', space=smem, size = 0x4, offset = 0x4, fixed_abs, tag = 'smem constant byte address 0x4 - core index']
  #allocation1 [shape = 'u32[144,128]{1,0:T(1,128)}', space=vmem, size = 0x12000, scoped, tag = 'internal scratch']
  #allocation2 [shape = 'f32[1]{0:T(128)S(6)}', space=smem, size = 0x200, scoped, tag = 'scoped memory for tpu_custom_call.1']
  %s0 = inlined_call_operand.vmem [shape: f32[2,4,256], index: 0, kind: input, shape index: {}]
  %s1 = inlined_call_operand.vmem [shape: f32[2,4,256], index: 1, kind: input, shape index: {}]
  %s2 = inlined_call_operand.vmem [shape: f32[8,4], index: 2, kind: input, shape index: {}]
  %s3 = inlined_call_operand.vmem [shape: f32[8,4], index: 3, kind: input, shape index: {}]
  %s4 = inlined_call_operand.vmem [shape: f32[8,1], index: 4, kind: input, shape index: {}]
  %s5 = inlined_call_operand.vmem [shape: f32[8,1], index: 5, kind: input, shape index: {}]
  %s6 = inlined_call_operand.<no memory space> [shape: f32[1], index: 6, kind: input, shape index: {}]
  %s7 = inlined_call_operand.hbm [shape: f32[2,4,256], index: 7, kind: output, shape index: {}]
  %s8 = sld [smem:[#allocation0]]
  $region38: #{tpu_custom_call.1} parent=0
    _
  %s10 = ssub.s32 1, %s8
  %s11 = scalar_select 0, %s10, %s8
  %12 = sst [smem:[#allocation2]] %s6
  $region1: #{tpu_custom_call.1} parent=0
    #allocation3 [shape = 'u8[8192]{0}', space=vmem, size = 0x2000, scoped, tag = 'output window, operand 0, single buffered']
    #allocation4 [shape = 's32[1]{0}', space=sflag, size = 0x4, scoped, tag = 'scoped memory for tpu_custom_call.1']
    %13 = vsyncpa [#allocation4], 0
    // Predicated region
    $region2: #{tpu_custom_call.1} parent=1 // pred_check
      _
    $region3: #{tpu_custom_call.1} parent=1 // pred_check_branch
      %15 = sbr.rel (0) target = $region5
    $region4: #{tpu_custom_call.1} parent=1 // pred_region
      _
    $region5: #{tpu_custom_call.1} parent=1 // pred_fallthru
      _
    // Predicated region
    $region6: #{tpu_custom_call.1} parent=1 // pred_check
      _
    $region7: #{tpu_custom_call.1} parent=1 // pred_check_branch
      %17 = sbr.rel (0) target = $region9
    $region8: #{tpu_custom_call.1} parent=1 // pred_region
      _
    $region9: #{tpu_custom_call.1} parent=1 // pred_fallthru
      _
    // Predicated region
    $region10: #{tpu_custom_call.1} parent=1 // pred_check
      _
    $region11: #{tpu_custom_call.1} parent=1 // pred_check_branch
      %19 = sbr.rel (0) target = $region13
    $region12: #{tpu_custom_call.1} parent=1 // pred_region
      _
    $region13: #{tpu_custom_call.1} parent=1 // pred_fallthru
      _
    // Predicated region
    $region14: #{tpu_custom_call.1} parent=1 // pred_check
      _
    $region15: #{tpu_custom_call.1} parent=1 // pred_check_branch
      %21 = sbr.rel (0) target = $region17
    $region16: #{tpu_custom_call.1} parent=1 // pred_region
      _
    $region17: #{tpu_custom_call.1} parent=1 // pred_fallthru
      _
    // Predicated region
    $region18: #{tpu_custom_call.1} parent=1 // pred_check
      _
    $region19: #{tpu_custom_call.1} parent=1 // pred_check_branch
      %23 = sbr.rel (0) target = $region21
    $region20: #{tpu_custom_call.1} parent=1 // pred_region
      _
    $region21: #{tpu_custom_call.1} parent=1 // pred_fallthru
      _
    // Predicated region
    $region22: #{tpu_custom_call.1} parent=1 // pred_check
      _
    $region23: #{tpu_custom_call.1} parent=1 // pred_check_branch
      %25 = sbr.rel (0) target = $region25
    $region24: #{tpu_custom_call.1} parent=1 // pred_region
      _
    $region25: #{tpu_custom_call.1} parent=1 // pred_fallthru
      _
    // Predicated region
    $region26: #{tpu_custom_call.1} parent=1 // pred_check
      _
    $region27: #{tpu_custom_call.1} parent=1 // pred_check_branch
      %27 = sbr.rel (0) target = $region29
    $region28: #{tpu_custom_call.1} parent=1 // pred_region
      _
    $region29: #{tpu_custom_call.1} parent=1 // pred_fallthru
      _
    %v28 = vld [vmem:[%s2] sm:$0xff]
    %v29 = vld [vmem:[%s3] sm:$0xff]
    %v30 = vld [vmem:[%s4] sm:$0xff]
    %v31 = vld [vmem:[%s5] sm:$0xff]
    %s32 = sld [smem:[#allocation2]]
    %v33 = vld [vmem:[%s0] sm:$0xff]
    %v34 = vld [vmem:[%s1] sm:$0xff]
    %v36 = vcombine.high %v34, %v34
    %vm37 = vcmask 31744
    %v39 = vsel %vm37, %v29, 0
    %vm41 = vcmask 1043456
    %v42 = vsel %vm41, %v34, 0
    %v44 = vsel %vm41, %v36, 0
    %46 = vmatprep.subr.mxu0 %v44
    %47 = vmatpush1.msra.mxu0 %v42
    %48 = vmatprep.subr.mxu0 0.0
    %49 = vmatpush1.msra.mxu0 0.0
    %50 = vmatprep.subr.mxu0 0.0
    %51 = vmatpush1.msra.mxu0 0.0
    %52 = vmatprep.subr.mxu0 0.0
    %53 = vmatpush1.msra.mxu0 0.0
    %54 = vmatprep.subr.mxu0 0.0
    %55 = vmatpush1.msra.mxu0 0.0
    %56 = vmatprep.subr.mxu0 0.0
    %57 = vmatpush1.msra.mxu0 0.0
    %58 = vmatprep.subr.mxu0 0.0
    %59 = vmatpush1.msra.mxu0 0.0
    %60 = vmatprep.subr.mxu0 0.0
    %61 = vmatpush1.msra.mxu0 0.0
    %62 = vmatprep.subr.mxu0 0.0
    %63 = vmatpush1.msra.mxu0 0.0
    %64 = vmatprep.subr.mxu0 0.0
    %65 = vmatpush1.msra.mxu0 0.0
    %66 = vmatprep.subr.mxu0 0.0
    %67 = vmatpush1.msra.mxu0 0.0
    %68 = vmatprep.subr.mxu0 0.0
    %69 = vmatpush1.msra.mxu0 0.0
    %70 = vmatprep.subr.mxu0 0.0
    %71 = vmatpush1.msra.mxu0 0.0
    %72 = vmatprep.subr.mxu0 0.0
    %73 = vmatpush1.msra.mxu0 0.0
    %74 = vmatprep.subr.mxu0 0.0
    %75 = vmatpush1.msra.mxu0 0.0
    %76 = vmatprep.subr.mxu0 0.0
    %77 = vmatpush1.msra.mxu0 0.0
    %78 = vmatprep.subr.mxu0 0.0
    %79 = vmatpush1.msra.mxu0 0.0
    %80 = vmatprep.subr.mxu0 0.0
    %81 = vmatpush1.msra.mxu0 0.0
    %82 = vmatprep.subr.mxu0 0.0
    %83 = vmatpush1.msra.mxu0 0.0
    %84 = vmatprep.subr.mxu0 0.0
    %85 = vmatpush1.msra.mxu0 0.0
    %86 = vmatprep.subr.mxu0 0.0
    %87 = vmatpush1.msra.mxu0 0.0
    %88 = vmatprep.subr.mxu0 0.0
    %89 = vmatpush1.msra.mxu0 0.0
    %90 = vmatprep.subr.mxu0 0.0
    %91 = vmatpush1.msra.mxu0 0.0
    %92 = vmatprep.subr.mxu0 0.0
    %93 = vmatpush1.msra.mxu0 0.0
    %94 = vmatprep.subr.mxu0 0.0
    %95 = vmatpush1.msra.mxu0 0.0
    %96 = vmatprep.subr.mxu0 0.0
    %97 = vmatpush1.msra.mxu0 0.0
    %98 = vmatprep.subr.mxu0 0.0
    %99 = vmatpush1.msra.mxu0 0.0
    %100 = vmatprep.subr.mxu0 0.0
    %101 = vmatpush1.msra.mxu0 0.0
    %102 = vmatprep.subr.mxu0 0.0
    %103 = vmatpush1.msra.mxu0 0.0
    %104 = vmatprep.subr.mxu0 0.0
    %105 = vmatpush1.msra.mxu0 0.0
    %106 = vmatprep.subr.mxu0 0.0
    %107 = vmatpush1.msra.mxu0 0.0
    %108 = vmatprep.subr.mxu0 0.0
    %109 = vmatpush1.msra.mxu0 0.0
    %110 = vmatprep.mubr.f32.mxu0 0.0
    %111 = vmatmul.mubr.f32.gmra.mrb[0].mxu0 %v39
    %v112 = vpop.f32.mrb[0].mxu0
    %v113 = vadd.f32 0.0, %v112
    %v114 = vpop.f32.mrb[0].mxu0
    %v115 = vadd.f32 0.0, %v114
    %116 = vdwg.mxu0
    %v118 = vcombine.high %v33, %v33
    %v120 = vsel %vm37, %v28, 0
    %v122 = vsel %vm41, %v33, 0
    %v124 = vsel %vm41, %v118, 0
    %126 = vmatprep.subr.mxu0 %v124
    %127 = vmatpush1.msra.mxu0 %v122
    %128 = vmatprep.subr.mxu0 0.0
    %129 = vmatpush1.msra.mxu0 0.0
    %130 = vmatprep.subr.mxu0 0.0
    %131 = vmatpush1.msra.mxu0 0.0
    %132 = vmatprep.subr.mxu0 0.0
    %133 = vmatpush1.msra.mxu0 0.0
    %134 = vmatprep.subr.mxu0 0.0
    %135 = vmatpush1.msra.mxu0 0.0
    %136 = vmatprep.subr.mxu0 0.0
    %137 = vmatpush1.msra.mxu0 0.0
    %138 = vmatprep.subr.mxu0 0.0
    %139 = vmatpush1.msra.mxu0 0.0
    %140 = vmatprep.subr.mxu0 0.0
    %141 = vmatpush1.msra.mxu0 0.0
    %142 = vmatprep.subr.mxu0 0.0
    %143 = vmatpush1.msra.mxu0 0.0
    %144 = vmatprep.subr.mxu0 0.0
    %145 = vmatpush1.msra.mxu0 0.0
    %146 = vmatprep.subr.mxu0 0.0
    %147 = vmatpush1.msra.mxu0 0.0
    %148 = vmatprep.subr.mxu0 0.0
    %149 = vmatpush1.msra.mxu0 0.0
    %150 = vmatprep.subr.mxu0 0.0
    %151 = vmatpush1.msra.mxu0 0.0
    %152 = vmatprep.subr.mxu0 0.0
    %153 = vmatpush1.msra.mxu0 0.0
    %154 = vmatprep.subr.mxu0 0.0
    %155 = vmatpush1.msra.mxu0 0.0
    %156 = vmatprep.subr.mxu0 0.0
    %157 = vmatpush1.msra.mxu0 0.0
    %158 = vmatprep.subr.mxu0 0.0
    %159 = vmatpush1.msra.mxu0 0.0
    %160 = vmatprep.subr.mxu0 0.0
    %161 = vmatpush1.msra.mxu0 0.0
    %162 = vmatprep.subr.mxu0 0.0
    %163 = vmatpush1.msra.mxu0 0.0
    %164 = vmatprep.subr.mxu0 0.0
    %165 = vmatpush1.msra.mxu0 0.0
    %166 = vmatprep.subr.mxu0 0.0
    %167 = vmatpush1.msra.mxu0 0.0
    %168 = vmatprep.subr.mxu0 0.0
    %169 = vmatpush1.msra.mxu0 0.0
    %170 = vmatprep.subr.mxu0 0.0
    %171 = vmatpush1.msra.mxu0 0.0
    %172 = vmatprep.subr.mxu0 0.0
    %173 = vmatpush1.msra.mxu0 0.0
    %174 = vmatprep.subr.mxu0 0.0
    %175 = vmatpush1.msra.mxu0 0.0
    %176 = vmatprep.subr.mxu0 0.0
    %177 = vmatpush1.msra.mxu0 0.0
    %178 = vmatprep.subr.mxu0 0.0
    %179 = vmatpush1.msra.mxu0 0.0
    %180 = vmatprep.subr.mxu0 0.0
    %181 = vmatpush1.msra.mxu0 0.0
    %182 = vmatprep.subr.mxu0 0.0
    %183 = vmatpush1.msra.mxu0 0.0
    %184 = vmatprep.subr.mxu0 0.0
    %185 = vmatpush1.msra.mxu0 0.0
    %186 = vmatprep.subr.mxu0 0.0
    %187 = vmatpush1.msra.mxu0 0.0
    %188 = vmatprep.subr.mxu0 0.0
    %189 = vmatpush1.msra.mxu0 0.0
    %190 = vmatprep.mubr.f32.mxu0 0.0
    %191 = vmatmul.mubr.f32.gmra.mrb[0].mxu0 %v120
    %v192 = vpop.f32.mrb[0].mxu0
    %v193 = vadd.f32 %v113, %v192
    %v194 = vpop.f32.mrb[0].mxu0
    %v195 = vadd.f32 %v115, %v194
    %196 = vdwg.mxu0
    %198 = vset.pattern.permute.xlu0 0
    %199 = vperm.xlu0 %198, %v30
    %v200 = vpop.permute.xlu0 %199
    %v202 = vadd.f32 %v193, %v200
    %v203 = vadd.f32 %v195, %v200
    %v204 = vmax.f32 %v202, 0.0
    %v205 = vmax.f32 %v203, 0.0
    %207 = vset.pattern.permute.xlu0 0
    %208 = vperm.xlu0 %207, %v31
    %v209 = vpop.permute.xlu0 %208
    %v211 = vmul.f32 %v204, %v209
    %v212 = vmul.f32 %v205, %v209
    %v213 = vrot.slane %v211, 4
    %v214 = vadd.f32 %v211, %v213
    %v215 = vrot.slane %v214, 2
    %v216 = vadd.f32 %v214, %v215
    %v217 = vrot.slane %v216, 1
    %v218 = vadd.f32 %v216, %v217
    %v219 = vrot.slane %v212, 4
    %v220 = vadd.f32 %v212, %v219
    %v221 = vrot.slane %v220, 2
    %v222 = vadd.f32 %v220, %v221
    %v223 = vrot.slane %v222, 1
    %v224 = vadd.f32 %v222, %v223
    %v225 = vstv %s32
    %v226 = vadd.f32 %v218, %v225
    %v227 = vadd.f32 %v224, %v225
    %v228 = vxor.u32 %v226, 2147483648
    %v229 = vxor.u32 %v227, 2147483648
    %v230 = vmul.f32 %v228, 1.442695
    %v231 = vpow.pop %v230
    %v232 = vmul.f32 %v229, 1.442695
    %v233 = vpow.pop %v232
    %v234 = vadd.f32 %v231, 1.0
    %v235 = vadd.f32 %v233, 1.0
    %v236 = vrcp.pop %v234
    %v237 = vmul.f32 1.0, %v236
    %v238 = vrcp.pop %v235
    %v239 = vmul.f32 1.0, %v238
    %v242 = vcombine.low %v237, %v239
    %v244 = vmul.f32 %v34, %v242
    %245 = vst [vmem:[#allocation3] sm:$0xff] %v244
    %s246 = scalar_lea.vmem %s0, 8
    %v247 = vld [vmem:[%s246] sm:$0xff]
    %s248 = scalar_lea.vmem %s1, 8
    %v249 = vld [vmem:[%s248] sm:$0xff]
    %v251 = vcombine.high %v249, %v249
    %v252 = vsel %vm41, %v249, 0
    %v254 = vsel %vm41, %v251, 0
    %256 = vmatprep.subr.mxu0 %v254
    %257 = vmatpush1.msra.mxu0 %v252
    %258 = vmatprep.subr.mxu0 0.0
    %259 = vmatpush1.msra.mxu0 0.0
    %260 = vmatprep.subr.mxu0 0.0
    %261 = vmatpush1.msra.mxu0 0.0
    %262 = vmatprep.subr.mxu0 0.0
    %263 = vmatpush1.msra.mxu0 0.0
    %264 = vmatprep.subr.mxu0 0.0
    %265 = vmatpush1.msra.mxu0 0.0
    %266 = vmatprep.subr.mxu0 0.0
    %267 = vmatpush1.msra.mxu0 0.0
    %268 = vmatprep.subr.mxu0 0.0
    %269 = vmatpush1.msra.mxu0 0.0
    %270 = vmatprep.subr.mxu0 0.0
    %271 = vmatpush1.msra.mxu0 0.0
    %272 = vmatprep.subr.mxu0 0.0
    %273 = vmatpush1.msra.mxu0 0.0
    %274 = vmatprep.subr.mxu0 0.0
    %275 = vmatpush1.msra.mxu0 0.0
    %276 = vmatprep.subr.mxu0 0.0
    %277 = vmatpush1.msra.mxu0 0.0
    %278 = vmatprep.subr.mxu0 0.0
    %279 = vmatpush1.msra.mxu0 0.0
    %280 = vmatprep.subr.mxu0 0.0
    %281 = vmatpush1.msra.mxu0 0.0
    %282 = vmatprep.subr.mxu0 0.0
    %283 = vmatpush1.msra.mxu0 0.0
    %284 = vmatprep.subr.mxu0 0.0
    %285 = vmatpush1.msra.mxu0 0.0
    %286 = vmatprep.subr.mxu0 0.0
    %287 = vmatpush1.msra.mxu0 0.0
    %288 = vmatprep.subr.mxu0 0.0
    %289 = vmatpush1.msra.mxu0 0.0
    %290 = vmatprep.subr.mxu0 0.0
    %291 = vmatpush1.msra.mxu0 0.0
    %292 = vmatprep.subr.mxu0 0.0
    %293 = vmatpush1.msra.mxu0 0.0
    %294 = vmatprep.subr.mxu0 0.0
    %295 = vmatpush1.msra.mxu0 0.0
    %296 = vmatprep.subr.mxu0 0.0
    %297 = vmatpush1.msra.mxu0 0.0
    %298 = vmatprep.subr.mxu0 0.0
    %299 = vmatpush1.msra.mxu0 0.0
    %300 = vmatprep.subr.mxu0 0.0
    %301 = vmatpush1.msra.mxu0 0.0
    %302 = vmatprep.subr.mxu0 0.0
    %303 = vmatpush1.msra.mxu0 0.0
    %304 = vmatprep.subr.mxu0 0.0
    %305 = vmatpush1.msra.mxu0 0.0
    %306 = vmatprep.subr.mxu0 0.0
    %307 = vmatpush1.msra.mxu0 0.0
    %308 = vmatprep.subr.mxu0 0.0
    %309 = vmatpush1.msra.mxu0 0.0
    %310 = vmatprep.subr.mxu0 0.0
    %311 = vmatpush1.msra.mxu0 0.0
    %312 = vmatprep.subr.mxu0 0.0
    %313 = vmatpush1.msra.mxu0 0.0
    %314 = vmatprep.subr.mxu0 0.0
    %315 = vmatpush1.msra.mxu0 0.0
    %316 = vmatprep.subr.mxu0 0.0
    %317 = vmatpush1.msra.mxu0 0.0
    %318 = vmatprep.subr.mxu0 0.0
    %319 = vmatpush1.msra.mxu0 0.0
    %320 = vmatprep.mubr.f32.mxu0 0.0
    %321 = vmatmul.mubr.f32.gmra.mrb[0].mxu0 %v39
    %v322 = vpop.f32.mrb[0].mxu0
    %v323 = vadd.f32 0.0, %v322
    %v324 = vpop.f32.mrb[0].mxu0
    %v325 = vadd.f32 0.0, %v324
    %326 = vdwg.mxu0
    %v328 = vcombine.high %v247, %v247
    %v329 = vsel %vm41, %v247, 0
    %v331 = vsel %vm41, %v328, 0
    %333 = vmatprep.subr.mxu0 %v331
    %334 = vmatpush1.msra.mxu0 %v329
    %335 = vmatprep.subr.mxu0 0.0
    %336 = vmatpush1.msra.mxu0 0.0
    %337 = vmatprep.subr.mxu0 0.0
    %338 = vmatpush1.msra.mxu0 0.0
    %339 = vmatprep.subr.mxu0 0.0
    %340 = vmatpush1.msra.mxu0 0.0
    %341 = vmatprep.subr.mxu0 0.0
    %342 = vmatpush1.msra.mxu0 0.0
    %343 = vmatprep.subr.mxu0 0.0
    %344 = vmatpush1.msra.mxu0 0.0
    %345 = vmatprep.subr.mxu0 0.0
    %346 = vmatpush1.msra.mxu0 0.0
    %347 = vmatprep.subr.mxu0 0.0
    %348 = vmatpush1.msra.mxu0 0.0
    %349 = vmatprep.subr.mxu0 0.0
    %350 = vmatpush1.msra.mxu0 0.0
    %351 = vmatprep.subr.mxu0 0.0
    %352 = vmatpush1.msra.mxu0 0.0
    %353 = vmatprep.subr.mxu0 0.0
    %354 = vmatpush1.msra.mxu0 0.0
    %355 = vmatprep.subr.mxu0 0.0
    %356 = vmatpush1.msra.mxu0 0.0
    %357 = vmatprep.subr.mxu0 0.0
    %358 = vmatpush1.msra.mxu0 0.0
    %359 = vmatprep.subr.mxu0 0.0
    %360 = vmatpush1.msra.mxu0 0.0
    %361 = vmatprep.subr.mxu0 0.0
    %362 = vmatpush1.msra.mxu0 0.0
    %363 = vmatprep.subr.mxu0 0.0
    %364 = vmatpush1.msra.mxu0 0.0
    %365 = vmatprep.subr.mxu0 0.0
    %366 = vmatpush1.msra.mxu0 0.0
    %367 = vmatprep.subr.mxu0 0.0
    %368 = vmatpush1.msra.mxu0 0.0
    %369 = vmatprep.subr.mxu0 0.0
    %370 = vmatpush1.msra.mxu0 0.0
    %371 = vmatprep.subr.mxu0 0.0
    %372 = vmatpush1.msra.mxu0 0.0
    %373 = vmatprep.subr.mxu0 0.0
    %374 = vmatpush1.msra.mxu0 0.0
    %375 = vmatprep.subr.mxu0 0.0
    %376 = vmatpush1.msra.mxu0 0.0
    %377 = vmatprep.subr.mxu0 0.0
    %378 = vmatpush1.msra.mxu0 0.0
    %379 = vmatprep.subr.mxu0 0.0
    %380 = vmatpush1.msra.mxu0 0.0
    %381 = vmatprep.subr.mxu0 0.0
    %382 = vmatpush1.msra.mxu0 0.0
    %383 = vmatprep.subr.mxu0 0.0
    %384 = vmatpush1.msra.mxu0 0.0
    %385 = vmatprep.subr.mxu0 0.0
    %386 = vmatpush1.msra.mxu0 0.0
    %387 = vmatprep.subr.mxu0 0.0
    %388 = vmatpush1.msra.mxu0 0.0
    %389 = vmatprep.subr.mxu0 0.0
    %390 = vmatpush1.msra.mxu0 0.0
    %391 = vmatprep.subr.mxu0 0.0
    %392 = vmatpush1.msra.mxu0 0.0
    %393 = vmatprep.subr.mxu0 0.0
    %394 = vmatpush1.msra.mxu0 0.0
    %395 = vmatprep.subr.mxu0 0.0
    %396 = vmatpush1.msra.mxu0 0.0
    %397 = vmatprep.mubr.f32.mxu0 0.0
    %398 = vmatmul.mubr.f32.gmra.mrb[0].mxu0 %v120
    %v399 = vpop.f32.mrb[0].mxu0
    %v400 = vadd.f32 %v323, %v399
    %v401 = vpop.f32.mrb[0].mxu0
    %v402 = vadd.f32 %v325, %v401
    %403 = vdwg.mxu0
    %v404 = vadd.f32 %v400, %v200
    %v405 = vadd.f32 %v402, %v200
    %v406 = vmax.f32 %v404, 0.0
    %v407 = vmax.f32 %v405, 0.0
    %v408 = vmul.f32 %v406, %v209
    %v409 = vmul.f32 %v407, %v209
    %v410 = vrot.slane %v408, 4
    %v411 = vadd.f32 %v408, %v410
    %v412 = vrot.slane %v411, 2
    %v413 = vadd.f32 %v411, %v412
    %v414 = vrot.slane %v413, 1
    %v415 = vadd.f32 %v413, %v414
    %v416 = vrot.slane %v409, 4
    %v417 = vadd.f32 %v409, %v416
    %v418 = vrot.slane %v417, 2
    %v419 = vadd.f32 %v417, %v418
    %v420 = vrot.slane %v419, 1
    %v421 = vadd.f32 %v419, %v420
    %v422 = vadd.f32 %v415, %v225
    %v423 = vadd.f32 %v421, %v225
    %v424 = vxor.u32 %v422, 2147483648
    %v425 = vxor.u32 %v423, 2147483648
    %v426 = vmul.f32 %v424, 1.442695
    %v427 = vpow.pop %v426
    %v428 = vmul.f32 %v425, 1.442695
    %v429 = vpow.pop %v428
    %v430 = vadd.f32 %v427, 1.0
    %v431 = vadd.f32 %v429, 1.0
    %v432 = vrcp.pop %v430
    %v433 = vmul.f32 1.0, %v432
    %v434 = vrcp.pop %v431
    %v435 = vmul.f32 1.0, %v434
    %v438 = vcombine.low %v433, %v435
    %v440 = vmul.f32 %v249, %v438
    %s441 = scalar_lea.vmem [#allocation3], 8
    %442 = vst [vmem:[%s441] sm:$0xff] %v440
    // Predicated region
    $region30: #{tpu_custom_call.1} parent=1 // pred_check
      _
    $region31: #{tpu_custom_call.1} parent=1 // pred_check_branch
      %444 = sbr.rel (0) target = $region33
    $region32: #{tpu_custom_call.1} parent=1 // pred_region
      %s446 = ssub.s32 256, 256
      %447 = vsyncadd [#allocation4], %s446
      %s448 = sshll.u32 [#allocation3], 4
      %s449 = int_to_ptr.vmem [resolvable:$true] %s448
      %454 = dma.vmem_to_hbm [thread:$0]  %s449, 256, %s7, [#allocation4], 128, 128, 8
    $region33: #{tpu_custom_call.1} parent=1 // pred_fallthru
      _
    // Predicated region
    $region34: #{tpu_custom_call.1} parent=1 // pred_check
      _
    $region35: #{tpu_custom_call.1} parent=1 // pred_check_branch
      %456 = sbr.rel (0) target = $region37
    $region36: #{tpu_custom_call.1} parent=1 // pred_region
      %457 = dma.done [#allocation4], 256
    $region37: #{tpu_custom_call.1} parent=1 // pred_fallthru
      _
    %458 = vsyncpa [#allocation4], 1

</llo_original>
